<compile_context>
chip_gen: v7x
topology: tpu7x:2x2x1
jax: 0.10.0
libtpu: 0.0.40
codegen_flags: <defaults>
</compile_context>

<pallas_src>
import functools

import jax
import jax.numpy as jnp
from jax.experimental import pallas as pl
from jax.experimental.pallas import tpu as pltpu


def _gradient_loss_kernel(o_ref, t_ref, out_ref, *, h: int):
    """Partial gradient-loss sum for one chunk of whole planes.

    o_ref / t_ref: (R, W) block holding R // h complete H x W planes flattened
    along rows.  out_ref: (8, W) partial-sum tile (row 0 carries per-lane sums
    in the roll path; element [0, 0] carries the chunk sum in the slice path).
    """
    o = o_ref[...].astype(jnp.float32)
    t = t_ref[...].astype(jnp.float32)
    r, w = o.shape

    # Boundary contributions of the zero padding reduce to | |o| - |t| |.
    edge = jnp.abs(jnp.abs(o) - jnp.abs(t))

    # Thin iotas: row index within its plane (R, 1) and lane index (1, W).
    # Masks broadcast inside jnp.where, keeping int iota/mod off the hot path.
    row1 = jax.lax.broadcasted_iota(jnp.int32, (r, 1), 0)
    rip1 = row1 % h  # row-in-plane, (R, 1)

    aligned = (r % 8 == 0) and (w % 128 == 0)

    if aligned:
        # Fast path: shifted neighbors via XLU rolls, masks on the VPU
        # (no relayout copies from misaligned slices).
        col1 = jax.lax.broadcasted_iota(jnp.int32, (1, w), 1)
        gx = jnp.abs(jnp.abs(o - pltpu.roll(o, 1, axis=1))
                     - jnp.abs(t - pltpu.roll(t, 1, axis=1)))
        gy = jnp.abs(jnp.abs(o - pltpu.roll(o, 1, axis=0))
                     - jnp.abs(t - pltpu.roll(t, 1, axis=0)))
        loss = (jnp.where(col1 == 0, edge, gx)          # j'=0 column + interior x
                + jnp.where(rip1 == 0, edge, gy)        # i'=0 row    + interior y
                + jnp.where(col1 == w - 1, edge, 0.0)   # j'=W column
                + jnp.where(rip1 == h - 1, edge, 0.0))  # i'=H row
        partial = jnp.sum(loss, axis=0, keepdims=True)              # (1, w)
        sub8 = jax.lax.broadcasted_iota(jnp.int32, (8, w), 0)
        out_ref[...] = jnp.where(sub8 == 0, partial, 0.0)
    else:
        # Safe path for lane-unaligned widths: interior diffs on slices plus
        # analytic boundary terms, reduced to a single scalar per chunk.
        total = jnp.float32(0.0)
        if w > 1:
            total += jnp.sum(jnp.abs(jnp.abs(o[:, 1:] - o[:, :-1])
                                     - jnp.abs(t[:, 1:] - t[:, :-1])))
        total += jnp.sum(edge[:, :1]) + jnp.sum(edge[:, w - 1:])
        if r > 1:
            rr1 = jax.lax.broadcasted_iota(jnp.int32, (r - 1, 1), 0)
            in_plane = ((rr1 + 1) % h) != 0  # drop row pairs straddling planes
            dy = jnp.abs(jnp.abs(o[1:, :] - o[:-1, :])
                         - jnp.abs(t[1:, :] - t[:-1, :]))
            total += jnp.sum(jnp.where(in_plane, dy, 0.0))
        total += jnp.sum(jnp.where(rip1 == 0, edge, 0.0))
        total += jnp.sum(jnp.where(rip1 == h - 1, edge, 0.0))
        sub8 = jax.lax.broadcasted_iota(jnp.int32, (8, w), 0)
        lane = jax.lax.broadcasted_iota(jnp.int32, (8, w), 1)
        out_ref[...] = jnp.where((sub8 == 0) & (lane == 0), total, 0.0)


def _pick_planes_per_chunk(planes, h, w, itemsize,
                           target_bytes=2 * 1024 * 1024):
    """Largest planes-per-chunk that keeps a tile <= target and >=2 chunks."""
    m = planes * h
    sub_mult = max(8, 32 // max(1, itemsize))   # (8,128)-rule multiple per dtype
    cand = []
    for p in range(1, planes + 1):
        if planes % p:
            continue
        rows = p * h
        if rows != m and rows % sub_mult != 0:
            continue
        cand.append(p)
    fitting = [p for p in cand if p * h * w * itemsize <= target_bytes]
    multi = [p for p in fitting if planes // p >= 2]  # v7x megacore wants >=2
    if multi:
        return max(multi)
    if fitting:
        return max(fitting)
    # TODO(synk): for very large planes, additionally tile along H/W with a
    # 1-element halo instead of loading a whole plane per grid step.
    return min(cand)


def gradient_loss(output, target):
    """Pallas TPU implementation of GradientLoss.forward(output, target)."""
    assert output.shape == target.shape, (output.shape, target.shape)
    n, c, h, w = output.shape
    assert c >= 3, "GradientLoss uses channels 0..2"

    o = output if c == 3 else output[:, :3]
    t = target if c == 3 else target[:, :3]

    planes = n * 3
    m = planes * h
    # Free reshape of the contiguous NCHW tensor; no pad / dtype copies in HBM.
    o2 = o.reshape(m, w)
    t2 = t.reshape(m, w)

    itemsize = jnp.dtype(o2.dtype).itemsize
    p = _pick_planes_per_chunk(planes, h, w, itemsize)
    n_chunks = planes // p
    rows = p * h

    kernel = functools.partial(_gradient_loss_kernel, h=h)
    cost = pl.CostEstimate(
        flops=30 * m * w,
        transcendentals=0,
        bytes_accessed=2 * m * w * itemsize + n_chunks * 8 * w * 4,
    )
    partials = pl.pallas_call(
        kernel,
        out_shape=jax.ShapeDtypeStruct((n_chunks, 8, w), jnp.float32),
        grid=(n_chunks,),
        in_specs=[
            pl.BlockSpec((rows, w), lambda i: (i, 0)),
            pl.BlockSpec((rows, w), lambda i: (i, 0)),
        ],
        out_specs=pl.BlockSpec((None, 8, w), lambda i: (i, 0, 0)),
        compiler_params=pltpu.CompilerParams(
            dimension_semantics=("parallel",)),
        cost_estimate=cost,
    )(o2, t2)

    count = planes * (h + 1) * (w + 1)  # mean over (N, 3, H+1, W+1)
    return jnp.sum(partials) / jnp.float32(count)


def _reference(output, target):
    """Pure-JAX reference mirroring the PyTorch module exactly."""
    def grads(x):
        xp = jnp.pad(x, ((0, 0), (0, 0), (1, 1), (1, 1)))
        gx = jnp.abs(xp[:, :, 1:, 1:] - xp[:, :, 1:, :-1])
        gy = jnp.abs(xp[:, :, 1:, 1:] - xp[:, :, :-1, 1:])
        return gx, gy

    o = output[:, :3].astype(jnp.float32)
    t = target[:, :3].astype(jnp.float32)
    ogx, ogy = grads(o)
    tgx, tgy = grads(t)
    return (jnp.abs(ogx - tgx) + jnp.abs(ogy - tgy)).mean()


if __name__ == "__main__":
    key = jax.random.PRNGKey(0)
    k1, k2, k3, k4 = jax.random.split(key, 4)

    # Case 1: small RGB images, lane-unaligned width (slice path, 2 chunks).
    o1 = jax.random.normal(k1, (2, 3, 16, 16), dtype=jnp.float32)
    t1 = jax.random.normal(k2, (2, 3, 16, 16), dtype=jnp.float32)
    l1 = gradient_loss(o1, t1)
    jax.block_until_ready(l1)
    r1 = _reference(o1, t1)
    assert jnp.allclose(l1, r1, rtol=1e-5, atol=1e-5), (l1, r1)

    # Case 2: lane-aligned width (roll fast path, multi-plane chunks).
    o2 = jax.random.normal(k3, (2, 3, 8, 128), dtype=jnp.float32)
    t2 = jax.random.normal(k4, (2, 3, 8, 128), dtype=jnp.float32)
    l2 = gradient_loss(o2, t2)
    jax.block_until_ready(l2)
    r2 = _reference(o2, t2)
    assert jnp.allclose(l2, r2, rtol=1e-5, atol=1e-5), (l2, r2)

    print("KERNEL_OK")
</pallas_src>

<mosaic_0001>
module attributes {stable_mosaic.version = 11 : i64} {
  func.func @_gradient_loss_kernel(%arg0: i32, %arg1: memref<48x16xf32, #tpu.memory_space<vmem>>, %arg2: memref<48x16xf32, #tpu.memory_space<vmem>>, %arg3: memref<1x8x16xf32, #tpu.memory_space<vmem>>) attributes {dimension_semantics = [#tpu.dimension_semantics<parallel>], iteration_bounds = array<i64: 2>, scalar_prefetch = 0 : i64, scratch_operands = 0 : i64, tpu.core_type = #tpu.core_type<tc>, window_params = [{transform_indices = @transform_0, window_bounds = array<i64: 48, 16>}, {transform_indices = @transform_1, window_bounds = array<i64: 48, 16>}, {transform_indices = @transform_2, window_bounds = array<i64: 1, 8, 16>}]} {
    %c0 = arith.constant 0 : index
    %c0_0 = arith.constant 0 : index
    %0 = vector.load %arg1[%c0, %c0_0] : memref<48x16xf32, #tpu.memory_space<vmem>>, vector<48x16xf32>
    %c0_1 = arith.constant 0 : index
    %c0_2 = arith.constant 0 : index
    %1 = vector.load %arg2[%c0_1, %c0_2] : memref<48x16xf32, #tpu.memory_space<vmem>>, vector<48x16xf32>
    %2 = math.absf %0 : vector<48x16xf32>
    %3 = math.absf %1 : vector<48x16xf32>
    %4 = arith.subf %2, %3 : vector<48x16xf32>
    %5 = math.absf %4 : vector<48x16xf32>
    %6 = tpu.iota {dimensions = array<i32: 0>} : vector<48x1xi32>
    %c16_i32 = arith.constant 16 : i32
    %c0_i32 = arith.constant 0 : i32
    %7 = arith.cmpi eq, %c16_i32, %c0_i32 : i32
    %c1_i32 = arith.constant 1 : i32
    %8 = arith.select %7, %c1_i32, %c16_i32 : i32
    %9 = vector.broadcast %8 : i32 to vector<48x1xi32>
    %10 = arith.remsi %6, %9 : vector<48x1xi32>
    %c0_i32_3 = arith.constant 0 : i32
    %11 = vector.broadcast %c0_i32_3 : i32 to vector<48x1xi32>
    %12 = arith.cmpi ne, %10, %11 : vector<48x1xi32>
    %c0_i32_4 = arith.constant 0 : i32
    %13 = vector.broadcast %c0_i32_4 : i32 to vector<48x1xi32>
    %14 = arith.cmpi slt, %10, %13 : vector<48x1xi32>
    %c0_i32_5 = arith.constant 0 : i32
    %15 = arith.cmpi slt, %8, %c0_i32_5 : i32
    %16 = vector.broadcast %15 : i1 to vector<48x1xi1>
    %17 = vector.broadcast %16 : vector<48x1xi1> to vector<48x1xi1>
    %18 = arith.xori %14, %17 : vector<48x1xi1>
    %19 = arith.andi %18, %12 : vector<48x1xi1>
    %20 = vector.broadcast %8 : i32 to vector<48x1xi32>
    %21 = arith.addi %10, %20 : vector<48x1xi32>
    %22 = arith.select %19, %21, %10 : vector<48x1xi1>, vector<48x1xi32>
    %23 = vector.extract_strided_slice %0 {offsets = [0, 1], sizes = [48, 15], strides = [1, 1]} : vector<48x16xf32> to vector<48x15xf32>
    %24 = vector.extract_strided_slice %0 {offsets = [0, 0], sizes = [48, 15], strides = [1, 1]} : vector<48x16xf32> to vector<48x15xf32>
    %25 = arith.subf %23, %24 : vector<48x15xf32>
    %26 = math.absf %25 : vector<48x15xf32>
    %27 = vector.extract_strided_slice %1 {offsets = [0, 1], sizes = [48, 15], strides = [1, 1]} : vector<48x16xf32> to vector<48x15xf32>
    %28 = vector.extract_strided_slice %1 {offsets = [0, 0], sizes = [48, 15], strides = [1, 1]} : vector<48x16xf32> to vector<48x15xf32>
    %29 = arith.subf %27, %28 : vector<48x15xf32>
    %30 = math.absf %29 : vector<48x15xf32>
    %31 = arith.subf %26, %30 : vector<48x15xf32>
    %32 = math.absf %31 : vector<48x15xf32>
    %33 = vector.shape_cast %32 : vector<48x15xf32> to vector<1x48x15xf32>
    %cst = arith.constant dense<0.000000e+00> : vector<1xf32>
    %34 = vector.multi_reduction <add>, %33, %cst [1, 2] : vector<1x48x15xf32> to vector<1xf32>
    %35 = vector.shape_cast %34 : vector<1xf32> to vector<1x1x1xf32>
    %36 = vector.extract %35[0, 0, 0] : f32 from vector<1x1x1xf32>
    %cst_6 = arith.constant 0.000000e+00 : f32
    %37 = arith.addf %cst_6, %36 : f32
    %38 = vector.extract_strided_slice %5 {offsets = [0, 0], sizes = [48, 1], strides = [1, 1]} : vector<48x16xf32> to vector<48x1xf32>
    %39 = vector.shape_cast %38 : vector<48x1xf32> to vector<1x48x1xf32>
    %cst_7 = arith.constant dense<0.000000e+00> : vector<1xf32>
    %40 = vector.multi_reduction <add>, %39, %cst_7 [1, 2] : vector<1x48x1xf32> to vector<1xf32>
    %41 = vector.shape_cast %40 : vector<1xf32> to vector<1x1x1xf32>
    %42 = vector.extract %41[0, 0, 0] : f32 from vector<1x1x1xf32>
    %43 = vector.extract_strided_slice %5 {offsets = [0, 15], sizes = [48, 1], strides = [1, 1]} : vector<48x16xf32> to vector<48x1xf32>
    %44 = vector.shape_cast %43 : vector<48x1xf32> to vector<1x48x1xf32>
    %cst_8 = arith.constant dense<0.000000e+00> : vector<1xf32>
    %45 = vector.multi_reduction <add>, %44, %cst_8 [1, 2] : vector<1x48x1xf32> to vector<1xf32>
    %46 = vector.shape_cast %45 : vector<1xf32> to vector<1x1x1xf32>
    %47 = vector.extract %46[0, 0, 0] : f32 from vector<1x1x1xf32>
    %48 = arith.addf %42, %47 : f32
    %49 = arith.addf %37, %48 : f32
    %50 = tpu.iota {dimensions = array<i32: 0>} : vector<47x1xi32>
    %c1_i32_9 = arith.constant 1 : i32
    %51 = vector.broadcast %c1_i32_9 : i32 to vector<47x1xi32>
    %52 = arith.addi %50, %51 : vector<47x1xi32>
    %c16_i32_10 = arith.constant 16 : i32
    %c0_i32_11 = arith.constant 0 : i32
    %53 = arith.cmpi eq, %c16_i32_10, %c0_i32_11 : i32
    %c1_i32_12 = arith.constant 1 : i32
    %54 = arith.select %53, %c1_i32_12, %c16_i32_10 : i32
    %55 = vector.broadcast %54 : i32 to vector<47x1xi32>
    %56 = arith.remsi %52, %55 : vector<47x1xi32>
    %c0_i32_13 = arith.constant 0 : i32
    %57 = vector.broadcast %c0_i32_13 : i32 to vector<47x1xi32>
    %58 = arith.cmpi ne, %56, %57 : vector<47x1xi32>
    %c0_i32_14 = arith.constant 0 : i32
    %59 = vector.broadcast %c0_i32_14 : i32 to vector<47x1xi32>
    %60 = arith.cmpi slt, %56, %59 : vector<47x1xi32>
    %c0_i32_15 = arith.constant 0 : i32
    %61 = arith.cmpi slt, %54, %c0_i32_15 : i32
    %62 = vector.broadcast %61 : i1 to vector<47x1xi1>
    %63 = vector.broadcast %62 : vector<47x1xi1> to vector<47x1xi1>
    %64 = arith.xori %60, %63 : vector<47x1xi1>
    %65 = arith.andi %64, %58 : vector<47x1xi1>
    %66 = vector.broadcast %54 : i32 to vector<47x1xi32>
    %67 = arith.addi %56, %66 : vector<47x1xi32>
    %68 = arith.select %65, %67, %56 : vector<47x1xi1>, vector<47x1xi32>
    %c0_i32_16 = arith.constant 0 : i32
    %69 = vector.broadcast %c0_i32_16 : i32 to vector<47x1xi32>
    %70 = arith.cmpi ne, %68, %69 : vector<47x1xi32>
    %71 = vector.extract_strided_slice %0 {offsets = [1, 0], sizes = [47, 16], strides = [1, 1]} : vector<48x16xf32> to vector<47x16xf32>
    %72 = vector.extract_strided_slice %0 {offsets = [0, 0], sizes = [47, 16], strides = [1, 1]} : vector<48x16xf32> to vector<47x16xf32>
    %73 = arith.subf %71, %72 : vector<47x16xf32>
    %74 = math.absf %73 : vector<47x16xf32>
    %75 = vector.extract_strided_slice %1 {offsets = [1, 0], sizes = [47, 16], strides = [1, 1]} : vector<48x16xf32> to vector<47x16xf32>
    %76 = vector.extract_strided_slice %1 {offsets = [0, 0], sizes = [47, 16], strides = [1, 1]} : vector<48x16xf32> to vector<47x16xf32>
    %77 = arith.subf %75, %76 : vector<47x16xf32>
    %78 = math.absf %77 : vector<47x16xf32>
    %79 = arith.subf %74, %78 : vector<47x16xf32>
    %80 = math.absf %79 : vector<47x16xf32>
    %cst_17 = arith.constant 0.000000e+00 : f32
    %81 = vector.shape_cast %70 : vector<47x1xi1> to vector<47x1xi1>
    %82 = vector.broadcast %81 : vector<47x1xi1> to vector<47x16xi1>
    %83 = vector.broadcast %cst_17 : f32 to vector<47x16xf32>
    %84 = arith.select %82, %80, %83 : vector<47x16xi1>, vector<47x16xf32>
    %85 = vector.shape_cast %84 : vector<47x16xf32> to vector<1x47x16xf32>
    %cst_18 = arith.constant dense<0.000000e+00> : vector<1xf32>
    %86 = vector.multi_reduction <add>, %85, %cst_18 [1, 2] : vector<1x47x16xf32> to vector<1xf32>
    %87 = vector.shape_cast %86 : vector<1xf32> to vector<1x1x1xf32>
    %88 = vector.extract %87[0, 0, 0] : f32 from vector<1x1x1xf32>
    %89 = arith.addf %49, %88 : f32
    %c0_i32_19 = arith.constant 0 : i32
    %90 = vector.broadcast %c0_i32_19 : i32 to vector<48x1xi32>
    %91 = arith.cmpi eq, %22, %90 : vector<48x1xi32>
    %cst_20 = arith.constant 0.000000e+00 : f32
    %92 = vector.shape_cast %91 : vector<48x1xi1> to vector<48x1xi1>
    %93 = vector.broadcast %92 : vector<48x1xi1> to vector<48x16xi1>
    %94 = vector.broadcast %cst_20 : f32 to vector<48x16xf32>
    %95 = arith.select %93, %5, %94 : vector<48x16xi1>, vector<48x16xf32>
    %96 = vector.shape_cast %95 : vector<48x16xf32> to vector<1x48x16xf32>
    %cst_21 = arith.constant dense<0.000000e+00> : vector<1xf32>
    %97 = vector.multi_reduction <add>, %96, %cst_21 [1, 2] : vector<1x48x16xf32> to vector<1xf32>
    %98 = vector.shape_cast %97 : vector<1xf32> to vector<1x1x1xf32>
    %99 = vector.extract %98[0, 0, 0] : f32 from vector<1x1x1xf32>
    %100 = arith.addf %89, %99 : f32
    %c15_i32 = arith.constant 15 : i32
    %101 = vector.broadcast %c15_i32 : i32 to vector<48x1xi32>
    %102 = arith.cmpi eq, %22, %101 : vector<48x1xi32>
    %cst_22 = arith.constant 0.000000e+00 : f32
    %103 = vector.shape_cast %102 : vector<48x1xi1> to vector<48x1xi1>
    %104 = vector.broadcast %103 : vector<48x1xi1> to vector<48x16xi1>
    %105 = vector.broadcast %cst_22 : f32 to vector<48x16xf32>
    %106 = arith.select %104, %5, %105 : vector<48x16xi1>, vector<48x16xf32>
    %107 = vector.shape_cast %106 : vector<48x16xf32> to vector<1x48x16xf32>
    %cst_23 = arith.constant dense<0.000000e+00> : vector<1xf32>
    %108 = vector.multi_reduction <add>, %107, %cst_23 [1, 2] : vector<1x48x16xf32> to vector<1xf32>
    %109 = vector.shape_cast %108 : vector<1xf32> to vector<1x1x1xf32>
    %110 = vector.extract %109[0, 0, 0] : f32 from vector<1x1x1xf32>
    %111 = arith.addf %100, %110 : f32
    %112 = tpu.iota {dimensions = array<i32: 0>} : vector<8x16xi32>
    %113 = tpu.iota {dimensions = array<i32: 1>} : vector<8x16xi32>
    %c0_i32_24 = arith.constant 0 : i32
    %114 = vector.broadcast %c0_i32_24 : i32 to vector<8x16xi32>
    %115 = arith.cmpi eq, %112, %114 : vector<8x16xi32>
    %c0_i32_25 = arith.constant 0 : i32
    %116 = vector.broadcast %c0_i32_25 : i32 to vector<8x16xi32>
    %117 = arith.cmpi eq, %113, %116 : vector<8x16xi32>
    %118 = arith.andi %115, %117 : vector<8x16xi1>
    %cst_26 = arith.constant 0.000000e+00 : f32
    %119 = vector.broadcast %111 : f32 to vector<8x16xf32>
    %120 = vector.broadcast %cst_26 : f32 to vector<8x16xf32>
    %121 = arith.select %118, %119, %120 : vector<8x16xi1>, vector<8x16xf32>
    %c0_27 = arith.constant 0 : index
    %c0_28 = arith.constant 0 : index
    %c0_29 = arith.constant 0 : index
    %122 = vector.load %arg3[%c0_27, %c0_28, %c0_29] : memref<1x8x16xf32, #tpu.memory_space<vmem>>, vector<1x8x16xf32>
    %123 = vector.shape_cast %122 : vector<1x8x16xf32> to vector<8x16xf32>
    %124 = vector.shape_cast %121 : vector<8x16xf32> to vector<1x8x16xf32>
    tpu.vector_store %arg3[%c0_27, %c0_28, %c0_29], %124 {strides = array<i32>} : memref<1x8x16xf32, #tpu.memory_space<vmem>>, vector<1x8x16xf32>,
    return
  }
  func.func @transform_0(%arg0: i32) -> (i32, i32) {
    %c0_i32 = arith.constant 0 : i32
    %c0_i32_0 = arith.constant 0 : i32
    return %arg0, %c0_i32 : i32, i32
  }
  func.func @transform_1(%arg0: i32) -> (i32, i32) {
    %c0_i32 = arith.constant 0 : i32
    %c0_i32_0 = arith.constant 0 : i32
    return %arg0, %c0_i32 : i32, i32
  }
  func.func @transform_2(%arg0: i32) -> (i32, i32, i32) {
    %c0_i32 = arith.constant 0 : i32
    %c0_i32_0 = arith.constant 0 : i32
    %c0_i32_1 = arith.constant 0 : i32
    return %arg0, %c0_i32, %c0_i32_0 : i32, i32, i32
  }
}

</mosaic_0001>

<llo_original>
// kernel: tpu_custom_call.1
$region0: #{tpu_custom_call.1}
  #allocation0 [shape = 'u32[]', space=smem, size = 0x4, offset = 0x4, fixed_abs, tag = 'smem constant byte address 0x4 - core index']
  #allocation1 [shape = 'u32[144,128]{1,0:T(1,128)}', space=vmem, size = 0x12000, scoped, tag = 'internal scratch']
  %s0 = inlined_call_operand.vmem [shape: f32[96,16], index: 0, kind: input, shape index: {}]
  %s1 = inlined_call_operand.vmem [shape: f32[96,16], index: 1, kind: input, shape index: {}]
  %s2 = inlined_call_operand.hbm [shape: f32[2,8,16], index: 2, kind: output, shape index: {}]
  %s3 = sld [smem:[#allocation0]]
  $region41: #{tpu_custom_call.1} parent=0
    _
  %s5 = ssub.s32 1, %s3
  %s6 = scalar_select 0, %s5, %s3
  $region1: #{tpu_custom_call.1} parent=0
    #allocation2 [shape = 'u8[8192]{0}', space=vmem, size = 0x2000, scoped, tag = 'output window, operand 0']
    #allocation3 [shape = 's32[2]{0}', space=sflag, size = 0x8, scoped, tag = 'scoped memory for tpu_custom_call.1']
    %7 = vsyncpa [#allocation3], 0
    %s8 = scalar_lea.sflag [#allocation3], 1
    %9 = vsyncpa %s8, 0
    loop: start=0, step=1, limit=4
    $region2: #{tpu_custom_call.1} parent=1 // loop_pre_header
      _
    $region3: #{tpu_custom_call.1} parent=1 // loop_header
      %s11 = sphi 0, %s15
      %p12 = scmp.ge.s32.totalorder %s11, 4
      %s21 = sphi 0, %s23
      %s24 = sphi 0, %s21
      %s25 = sphi 0, %s24
      %s41 = sphi 0, %s25
      %s47 = sphi 0, %s49
      %s50 = sphi 0, %s47
      %s51 = sphi 0, %s50
      %s67 = sphi 0, %s51
      %s73 = sphi 0, %s75
      %s76 = sphi 0, %s73
      %s77 = sphi 0, %s76
      %s93 = sphi 0, %s77
    $region4: #{tpu_custom_call.1} parent=1 // loop_header_branch
      %14 = sbr.rel (%p12) target = $region8
    $region5: #{tpu_custom_call.1} parent=1 // loop_body
      %s16 = ssub.s32 %s11, 1
      %s17 = ssub.s32 %s11, 2
      %s18 = sadd.s32 %s11, 1
      %s19 = ssub.s32 %s11, %s18
      %p20 = scmp.eq.s32.totalorder %s19, 0
      %s22 = sadd.s32 %s21, 1
      %s23 = scalar_select %p20, %s21, %s22
      %p26 = pneg %p20
      %p27 = scmp.eq.s32.totalorder %s11, 1
      %p28 = por %p26, %p27
      %p29 = scmp.ne.s32.totalorder %s21, %s24
      %p30 = scmp.eq.s32.totalorder %s11, 0
      %p31 = por %p29, %p30
      %p32 = scmp.ne.s32.totalorder %s21, %s24
      %p33 = scmp.eq.s32.totalorder %s16, 1
      %p34 = por %p32, %p33
      %p35 = scmp.ne.s32.totalorder %s24, %s25
      %p36 = scmp.eq.s32.totalorder %s16, 0
      %p37 = por %p35, %p36
      %p38 = scmp.ne.s32.totalorder %s24, %s25
      %p39 = scmp.eq.s32.totalorder %s17, 1
      %p40 = por %p38, %p39
      %p42 = scmp.ne.s32.totalorder %s25, %s41
      %p43 = scmp.eq.s32.totalorder %s17, 0
      %p44 = por %p42, %p43
      %s45 = ssub.s32 %s11, %s18
      %p46 = scmp.eq.s32.totalorder %s45, 0
      %s48 = sadd.s32 %s47, 1
      %s49 = scalar_select %p46, %s47, %s48
      %p52 = pneg %p46
      %p53 = scmp.eq.s32.totalorder %s11, 1
      %p54 = por %p52, %p53
      %p55 = scmp.ne.s32.totalorder %s47, %s50
      %p56 = scmp.eq.s32.totalorder %s11, 0
      %p57 = por %p55, %p56
      %p58 = scmp.ne.s32.totalorder %s47, %s50
      %p59 = scmp.eq.s32.totalorder %s16, 1
      %p60 = por %p58, %p59
      %p61 = scmp.ne.s32.totalorder %s50, %s51
      %p62 = scmp.eq.s32.totalorder %s16, 0
      %p63 = por %p61, %p62
      %p64 = scmp.ne.s32.totalorder %s50, %s51
      %p65 = scmp.eq.s32.totalorder %s17, 1
      %p66 = por %p64, %p65
      %p68 = scmp.ne.s32.totalorder %s51, %s67
      %p69 = scmp.eq.s32.totalorder %s17, 0
      %p70 = por %p68, %p69
      %s71 = ssub.s32 %s11, %s18
      %p72 = scmp.eq.s32.totalorder %s71, 0
      %s74 = sadd.s32 %s73, 1
      %s75 = scalar_select %p72, %s73, %s74
      %p78 = pneg %p72
      %p79 = scmp.eq.s32.totalorder %s11, 1
      %p80 = por %p78, %p79
      %p81 = scmp.ne.s32.totalorder %s73, %s76
      %p82 = scmp.eq.s32.totalorder %s11, 0
      %p83 = por %p81, %p82
      %p84 = scmp.ne.s32.totalorder %s73, %s76
      %p85 = scmp.eq.s32.totalorder %s16, 1
      %p86 = por %p84, %p85
      %p87 = scmp.ne.s32.totalorder %s76, %s77
      %p88 = scmp.eq.s32.totalorder %s16, 0
      %p89 = por %p87, %p88
      %p90 = scmp.ne.s32.totalorder %s76, %s77
      %p91 = scmp.eq.s32.totalorder %s17, 1
      %p92 = por %p90, %p91
      %p94 = scmp.ne.s32.totalorder %s77, %s93
      %p95 = scmp.eq.s32.totalorder %s17, 0
      %p96 = por %p94, %p95
      %p97 = scmp.le.s32.totalorder 1, %s11
      %p98 = scmp.lt.s32.totalorder %s11, 3
      %p99 = pnand %p97, %p98
      %p100 = pneg %p99
      // Predicated region
      $region9: #{tpu_custom_call.1} parent=5 // pred_check
        _
      $region10: #{tpu_custom_call.1} parent=5 // pred_check_branch
        %102 = sbr.rel (%p99) target = $region12
      $region11: #{tpu_custom_call.1} parent=5 // pred_region
        %s103 = ssub.s32 %s11, 1
      $region12: #{tpu_custom_call.1} parent=5 // pred_fallthru
        _
      %p104 = scmp.lt.s32.totalorder %s11, 2
      // Predicated region
      $region13: #{tpu_custom_call.1} parent=5 // pred_check
        %p105 = pneg %p104
      $region14: #{tpu_custom_call.1} parent=5 // pred_check_branch
        %107 = sbr.rel (%p105) target = $region16
      $region15: #{tpu_custom_call.1} parent=5 // pred_region
        // Predicated region
        $region17: #{tpu_custom_call.1} parent=15 // pred_check
          %p108 = pneg %p31
        $region18: #{tpu_custom_call.1} parent=15 // pred_check_branch
          %110 = sbr.rel (%p108) target = $region20
        $region19: #{tpu_custom_call.1} parent=15 // pred_region
          %s111 = smul.u32 6, %s11
          %p112 = scmp.lt.s32.totalorder %s111, 11
          %s113 = scalar_select %p112, %s111, 11
          %s114 = smul.addr %s113, 8
          %s115 = scalar_lea.vmem %s0, %s114
          %s116 = smul.u32 6, %s11
        $region20: #{tpu_custom_call.1} parent=15 // pred_fallthru
          _
        // Predicated region
        $region21: #{tpu_custom_call.1} parent=15 // pred_check
          %p117 = pneg %p57
        $region22: #{tpu_custom_call.1} parent=15 // pred_check_branch
          %119 = sbr.rel (%p117) target = $region24
        $region23: #{tpu_custom_call.1} parent=15 // pred_region
          %s120 = smul.u32 6, %s11
          %p121 = scmp.lt.s32.totalorder %s120, 11
          %s122 = scalar_select %p121, %s120, 11
          %s123 = smul.addr %s122, 8
          %s124 = scalar_lea.vmem %s1, %s123
          %s125 = smul.u32 6, %s11
        $region24: #{tpu_custom_call.1} parent=15 // pred_fallthru
          _
      $region16: #{tpu_custom_call.1} parent=5 // pred_fallthru
        _
      %p126 = scmp.le.s32.totalorder 1, %s11
      %p127 = scmp.lt.s32.totalorder %s11, 3
      %p128 = pnand %p126, %p127
      %p129 = pneg %p128
      // Predicated region
      $region25: #{tpu_custom_call.1} parent=5 // pred_check
        _
      $region26: #{tpu_custom_call.1} parent=5 // pred_check_branch
        %131 = sbr.rel (%p128) target = $region28
      $region27: #{tpu_custom_call.1} parent=5 // pred_region
        %s132 = ssub.s32 %s11, 1
        %s133 = smul.u32 6, %s16
        %p134 = scmp.lt.s32.totalorder %s133, 11
        %s135 = scalar_select %p134, %s133, 11
        %s136 = smul.addr %s135, 8
        %s137 = scalar_lea.vmem %s0, %s136
        %p138 = pneg %p37
        %p139 = pneg %p34
        %s140 = smul.u32 6, %s16
        %p141 = scmp.lt.s32.totalorder %s140, 11
        %s142 = scalar_select %p141, %s140, 11
        %s143 = smul.addr %s142, 8
        %s144 = scalar_lea.vmem %s1, %s143
        %p145 = pneg %p63
        %p146 = pneg %p60
        %p147 = pneg %p89
        %p148 = pneg %p86
        %s149 = sand.u32 %s76, 1
        %s150 = scalar_lea.sflag [#allocation3], %s149
        %s151 = sand.u32 %s76, 1
        %s152 = smul.addr %s151, 8
        %s153 = scalar_lea.vmem [#allocation2], %s152
        %s154 = smul.u32 6, %s16
        %p155 = scmp.lt.s32.totalorder %s154, 11
        %s156 = scalar_select %p155, %s154, 11
        %s157 = smul.addr %s156, 8
        %s158 = scalar_lea.vmem %s0, %s157
        %s159 = smul.u32 6, %s16
        %s160 = smul.u32 6, %s16
        %p161 = scmp.lt.s32.totalorder %s160, 11
        %s162 = scalar_select %p161, %s160, 11
        %s163 = smul.addr %s162, 8
        %s164 = scalar_lea.vmem %s1, %s163
        %s165 = smul.u32 6, %s16
        %v166 = vld [vmem:[%s158] sm:$0xff]
        %v167 = vld [vmem:[%s158 + $0x8] sm:$0xff]
        %v168 = vld [vmem:[%s158 + $0x10] sm:$0xff]
        %v169 = vld [vmem:[%s158 + $0x18] sm:$0xff]
        %v170 = vld [vmem:[%s158 + $0x20] sm:$0xff]
        %v171 = vld [vmem:[%s158 + $0x28] sm:$0xff]
        %v172 = vld [vmem:[%s164] sm:$0xff]
        %v173 = vld [vmem:[%s164 + $0x8] sm:$0xff]
        %v174 = vld [vmem:[%s164 + $0x10] sm:$0xff]
        %v175 = vld [vmem:[%s164 + $0x18] sm:$0xff]
        %v176 = vld [vmem:[%s164 + $0x20] sm:$0xff]
        %v177 = vld [vmem:[%s164 + $0x28] sm:$0xff]
        %v178 = vand.u32 2147483647, %v166
        %v179 = vand.u32 2147483647, %v167
        %v180 = vand.u32 2147483647, %v168
        %v181 = vand.u32 2147483647, %v169
        %v182 = vand.u32 2147483647, %v170
        %v183 = vand.u32 2147483647, %v171
        %v184 = vand.u32 2147483647, %v172
        %v185 = vand.u32 2147483647, %v173
        %v186 = vand.u32 2147483647, %v174
        %v187 = vand.u32 2147483647, %v175
        %v188 = vand.u32 2147483647, %v176
        %v189 = vand.u32 2147483647, %v177
        %v190 = vsub.f32 %v178, %v184
        %v191 = vsub.f32 %v179, %v185
        %v192 = vsub.f32 %v180, %v186
        %v193 = vsub.f32 %v181, %v187
        %v194 = vsub.f32 %v182, %v188
        %v195 = vsub.f32 %v183, %v189
        %v196 = vand.u32 2147483647, %v190
        %v197 = vand.u32 2147483647, %v191
        %v198 = vand.u32 2147483647, %v192
        %v199 = vand.u32 2147483647, %v193
        %v200 = vand.u32 2147483647, %v194
        %v201 = vand.u32 2147483647, %v195
        %v202 = vlaneseq
        %v203 = vshrl.u32 %v202, 7
        %v204 = vadd.s32 %v203, 8
        %v205 = vadd.s32 %v203, 16
        %v206 = vadd.s32 %v203, 24
        %v207 = vadd.s32 %v203, 32
        %v208 = vadd.s32 %v203, 40
        %vm209 = vcmp.lt.s32.totalorder %v203, 0
        %v210 = vsub.s32 0, %v203
        %v211 = vsel %vm209, %v210, %v203
        %v212 = vshrl.u32 %v211, 4
        %v213 = vand.u32 %v211, 15
        %v214 = vsub.s32 0, %v213
        %v215 = vsel %vm209, %v214, %v213
        %vm216 = vcmp.lt.s32.totalorder %v204, 0
        %v217 = vsub.s32 0, %v204
        %v218 = vsel %vm216, %v217, %v204
        %v219 = vshrl.u32 %v218, 4
        %v220 = vand.u32 %v218, 15
        %v221 = vsub.s32 0, %v220
        %v222 = vsel %vm216, %v221, %v220
        %vm223 = vcmp.lt.s32.totalorder %v205, 0
        %v224 = vsub.s32 0, %v205
        %v225 = vsel %vm223, %v224, %v205
        %v226 = vshrl.u32 %v225, 4
        %v227 = vand.u32 %v225, 15
        %v228 = vsub.s32 0, %v227
        %v229 = vsel %vm223, %v228, %v227
        %vm230 = vcmp.lt.s32.totalorder %v206, 0
        %v231 = vsub.s32 0, %v206
        %v232 = vsel %vm230, %v231, %v206
        %v233 = vshrl.u32 %v232, 4
        %v234 = vand.u32 %v232, 15
        %v235 = vsub.s32 0, %v234
        %v236 = vsel %vm230, %v235, %v234
        %vm237 = vcmp.lt.s32.totalorder %v207, 0
        %v238 = vsub.s32 0, %v207
        %v239 = vsel %vm237, %v238, %v207
        %v240 = vshrl.u32 %v239, 4
        %v241 = vand.u32 %v239, 15
        %v242 = vsub.s32 0, %v241
        %v243 = vsel %vm237, %v242, %v241
        %vm244 = vcmp.lt.s32.totalorder %v208, 0
        %v245 = vsub.s32 0, %v208
        %v246 = vsel %vm244, %v245, %v208
        %v247 = vshrl.u32 %v246, 4
        %v248 = vand.u32 %v246, 15
        %v249 = vsub.s32 0, %v248
        %v250 = vsel %vm244, %v249, %v248
        %vm251 = vcmp.ne.s32.totalorder %v215, 0
        %vm252 = vcmp.ne.s32.totalorder %v222, 0
        %vm253 = vcmp.ne.s32.totalorder %v229, 0
        %vm254 = vcmp.ne.s32.totalorder %v236, 0
        %vm255 = vcmp.ne.s32.totalorder %v243, 0
        %vm256 = vcmp.ne.s32.totalorder %v250, 0
        %vm257 = vcmp.lt.s32.totalorder %v215, 0
        %vm258 = vcmp.lt.s32.totalorder %v222, 0
        %vm259 = vcmp.lt.s32.totalorder %v229, 0
        %vm260 = vcmp.lt.s32.totalorder %v236, 0
        %vm261 = vcmp.lt.s32.totalorder %v243, 0
        %vm262 = vcmp.lt.s32.totalorder %v250, 0
        %vm263 = vmand %vm257, %vm251
        %vm264 = vmand %vm258, %vm252
        %vm265 = vmand %vm259, %vm253
        %vm266 = vmand %vm260, %vm254
        %vm267 = vmand %vm261, %vm255
        %vm268 = vmand %vm262, %vm256
        %v269 = vadd.s32 %v215, 16
        %v270 = vadd.s32 %v222, 16
        %v271 = vadd.s32 %v229, 16
        %v272 = vadd.s32 %v236, 16
        %v273 = vadd.s32 %v243, 16
        %v274 = vadd.s32 %v250, 16
        %v275 = vsel %vm263, %v269, %v215
        %v276 = vsel %vm264, %v270, %v222
        %v277 = vsel %vm265, %v271, %v229
        %v278 = vsel %vm266, %v272, %v236
        %v279 = vsel %vm267, %v273, %v243
        %v280 = vsel %vm268, %v274, %v250
        %287 = vrot.lane.b32.xlu0 %v166, 1
        %v288 = vpop.permute.xlu0 %287
        %289 = vrot.lane.b32.xlu0 %v167, 1
        %v290 = vpop.permute.xlu0 %289
        %291 = vrot.lane.b32.xlu0 %v168, 1
        %v292 = vpop.permute.xlu0 %291
        %293 = vrot.lane.b32.xlu0 %v169, 1
        %v294 = vpop.permute.xlu0 %293
        %295 = vrot.lane.b32.xlu0 %v170, 1
        %v296 = vpop.permute.xlu0 %295
        %297 = vrot.lane.b32.xlu0 %v171, 1
        %v298 = vpop.permute.xlu0 %297
        %v305 = vsub.f32 %v166, %v288
        %v306 = vsub.f32 %v167, %v290
        %v307 = vsub.f32 %v168, %v292
        %v308 = vsub.f32 %v169, %v294
        %v309 = vsub.f32 %v170, %v296
        %v310 = vsub.f32 %v171, %v298
        %v311 = vand.u32 2147483647, %v305
        %v312 = vand.u32 2147483647, %v306
        %v313 = vand.u32 2147483647, %v307
        %v314 = vand.u32 2147483647, %v308
        %v315 = vand.u32 2147483647, %v309
        %v316 = vand.u32 2147483647, %v310
        %323 = vrot.lane.b32.xlu0 %v172, 1
        %v324 = vpop.permute.xlu0 %323
        %325 = vrot.lane.b32.xlu0 %v173, 1
        %v326 = vpop.permute.xlu0 %325
        %327 = vrot.lane.b32.xlu0 %v174, 1
        %v328 = vpop.permute.xlu0 %327
        %329 = vrot.lane.b32.xlu0 %v175, 1
        %v330 = vpop.permute.xlu0 %329
        %331 = vrot.lane.b32.xlu0 %v176, 1
        %v332 = vpop.permute.xlu0 %331
        %333 = vrot.lane.b32.xlu0 %v177, 1
        %v334 = vpop.permute.xlu0 %333
        %v341 = vsub.f32 %v172, %v324
        %v342 = vsub.f32 %v173, %v326
        %v343 = vsub.f32 %v174, %v328
        %v344 = vsub.f32 %v175, %v330
        %v345 = vsub.f32 %v176, %v332
        %v346 = vsub.f32 %v177, %v334
        %v347 = vand.u32 2147483647, %v341
        %v348 = vand.u32 2147483647, %v342
        %v349 = vand.u32 2147483647, %v343
        %v350 = vand.u32 2147483647, %v344
        %v351 = vand.u32 2147483647, %v345
        %v352 = vand.u32 2147483647, %v346
        %v353 = vsub.f32 %v311, %v347
        %v354 = vsub.f32 %v312, %v348
        %v355 = vsub.f32 %v313, %v349
        %v356 = vsub.f32 %v314, %v350
        %v357 = vsub.f32 %v315, %v351
        %v358 = vsub.f32 %v316, %v352
        %v359 = vand.u32 2147483647, %v353
        %v360 = vand.u32 2147483647, %v354
        %v361 = vand.u32 2147483647, %v355
        %v362 = vand.u32 2147483647, %v356
        %v363 = vand.u32 2147483647, %v357
        %v364 = vand.u32 2147483647, %v358
        %371 = vrot.lane.b32.xlu0 %v359, 127
        %v372 = vpop.permute.xlu0 %371
        %373 = vrot.lane.b32.xlu0 %v360, 127
        %v374 = vpop.permute.xlu0 %373
        %375 = vrot.lane.b32.xlu0 %v361, 127
        %v376 = vpop.permute.xlu0 %375
        %377 = vrot.lane.b32.xlu0 %v362, 127
        %v378 = vpop.permute.xlu0 %377
        %379 = vrot.lane.b32.xlu0 %v363, 127
        %v380 = vpop.permute.xlu0 %379
        %381 = vrot.lane.b32.xlu0 %v364, 127
        %v382 = vpop.permute.xlu0 %381
        %vm389 = vcmask 121856
        %v390 = vsel %vm389, %v372, 0.0
        %v391 = vsel %vm389, %v374, 0.0
        %v392 = vadd.f32 %v390, %v391
        %v393 = vsel %vm389, %v376, 0.0
        %v394 = vadd.f32 %v392, %v393
        %v395 = vsel %vm389, %v378, 0.0
        %v396 = vadd.f32 %v394, %v395
        %v397 = vsel %vm389, %v380, 0.0
        %v398 = vadd.f32 %v396, %v397
        %v399 = vsel %vm389, %v382, 0.0
        %v400 = vadd.f32 %v398, %v399
        %401 = vadd.xlane.f32.xlu0 %v400
        %v402 = vpop.xlane.xlu0 %401
        %v403 = vrot.slane %v402, 4
        %v404 = vadd.f32 %v402, %v403
        %v405 = vrot.slane %v404, 2
        %v406 = vadd.f32 %v404, %v405
        %v407 = vrot.slane %v406, 1
        %v408 = vadd.f32 %v406, %v407
        %s409 = vtos %v408
        %s410 = sadd.f32 %s409, 0.0
        %vm411 = vcmask 7168
        %v412 = vsel %vm411, %v196, 0.0
        %v413 = vsel %vm411, %v197, 0.0
        %v414 = vadd.f32 %v412, %v413
        %v415 = vsel %vm411, %v198, 0.0
        %v416 = vadd.f32 %v414, %v415
        %v417 = vsel %vm411, %v199, 0.0
        %v418 = vadd.f32 %v416, %v417
        %v419 = vsel %vm411, %v200, 0.0
        %v420 = vadd.f32 %v418, %v419
        %v421 = vsel %vm411, %v201, 0.0
        %v422 = vadd.f32 %v420, %v421
        %423 = vadd.xlane.f32.xlu0 %v422
        %v424 = vpop.xlane.xlu0 %423
        %v425 = vrot.slane %v424, 4
        %v426 = vadd.f32 %v424, %v425
        %v427 = vrot.slane %v426, 2
        %v428 = vadd.f32 %v426, %v427
        %v429 = vrot.slane %v428, 1
        %v430 = vadd.f32 %v428, %v429
        %s431 = vtos %v430
        %438 = vrot.lane.b32.xlu0 %v196, 113
        %v439 = vpop.permute.xlu0 %438
        %440 = vrot.lane.b32.xlu0 %v197, 113
        %v441 = vpop.permute.xlu0 %440
        %442 = vrot.lane.b32.xlu0 %v198, 113
        %v443 = vpop.permute.xlu0 %442
        %444 = vrot.lane.b32.xlu0 %v199, 113
        %v445 = vpop.permute.xlu0 %444
        %446 = vrot.lane.b32.xlu0 %v200, 113
        %v447 = vpop.permute.xlu0 %446
        %448 = vrot.lane.b32.xlu0 %v201, 113
        %v449 = vpop.permute.xlu0 %448
        %v456 = vsel %vm411, %v439, 0.0
        %v457 = vsel %vm411, %v441, 0.0
        %v458 = vadd.f32 %v456, %v457
        %v459 = vsel %vm411, %v443, 0.0
        %v460 = vadd.f32 %v458, %v459
        %v461 = vsel %vm411, %v445, 0.0
        %v462 = vadd.f32 %v460, %v461
        %v463 = vsel %vm411, %v447, 0.0
        %v464 = vadd.f32 %v462, %v463
        %v465 = vsel %vm411, %v449, 0.0
        %v466 = vadd.f32 %v464, %v465
        %467 = vadd.xlane.f32.xlu0 %v466
        %v468 = vpop.xlane.xlu0 %467
        %v469 = vrot.slane %v468, 4
        %v470 = vadd.f32 %v468, %v469
        %v471 = vrot.slane %v470, 2
        %v472 = vadd.f32 %v470, %v471
        %v473 = vrot.slane %v472, 1
        %v474 = vadd.f32 %v472, %v473
        %s475 = vtos %v474
        %s476 = sadd.f32 %s431, %s475
        %s477 = sadd.f32 %s410, %s476
        %v478 = vadd.s32 %v203, 1
        %v479 = vadd.s32 %v204, 1
        %v480 = vadd.s32 %v205, 1
        %v481 = vadd.s32 %v206, 1
        %v482 = vadd.s32 %v207, 1
        %v483 = vadd.s32 %v208, 1
        %vm484 = vcmp.lt.s32.totalorder %v478, 0
        %v485 = vsub.s32 0, %v478
        %v486 = vsel %vm484, %v485, %v478
        %v487 = vshrl.u32 %v486, 4
        %v488 = vand.u32 %v486, 15
        %v489 = vsub.s32 0, %v488
        %v490 = vsel %vm484, %v489, %v488
        %vm491 = vcmp.lt.s32.totalorder %v479, 0
        %v492 = vsub.s32 0, %v479
        %v493 = vsel %vm491, %v492, %v479
        %v494 = vshrl.u32 %v493, 4
        %v495 = vand.u32 %v493, 15
        %v496 = vsub.s32 0, %v495
        %v497 = vsel %vm491, %v496, %v495
        %vm498 = vcmp.lt.s32.totalorder %v480, 0
        %v499 = vsub.s32 0, %v480
        %v500 = vsel %vm498, %v499, %v480
        %v501 = vshrl.u32 %v500, 4
        %v502 = vand.u32 %v500, 15
        %v503 = vsub.s32 0, %v502
        %v504 = vsel %vm498, %v503, %v502
        %vm505 = vcmp.lt.s32.totalorder %v481, 0
        %v506 = vsub.s32 0, %v481
        %v507 = vsel %vm505, %v506, %v481
        %v508 = vshrl.u32 %v507, 4
        %v509 = vand.u32 %v507, 15
        %v510 = vsub.s32 0, %v509
        %v511 = vsel %vm505, %v510, %v509
        %vm512 = vcmp.lt.s32.totalorder %v482, 0
        %v513 = vsub.s32 0, %v482
        %v514 = vsel %vm512, %v513, %v482
        %v515 = vshrl.u32 %v514, 4
        %v516 = vand.u32 %v514, 15
        %v517 = vsub.s32 0, %v516
        %v518 = vsel %vm512, %v517, %v516
        %vm519 = vcmp.lt.s32.totalorder %v483, 0
        %v520 = vsub.s32 0, %v483
        %v521 = vsel %vm519, %v520, %v483
        %v522 = vshrl.u32 %v521, 4
        %v523 = vand.u32 %v521, 15
        %v524 = vsub.s32 0, %v523
        %v525 = vsel %vm519, %v524, %v523
        %vm526 = vcmp.ne.s32.totalorder %v490, 0
        %vm527 = vcmp.ne.s32.totalorder %v497, 0
        %vm528 = vcmp.ne.s32.totalorder %v504, 0
        %vm529 = vcmp.ne.s32.totalorder %v511, 0
        %vm530 = vcmp.ne.s32.totalorder %v518, 0
        %vm531 = vcmp.ne.s32.totalorder %v525, 0
        %vm532 = vcmp.lt.s32.totalorder %v490, 0
        %vm533 = vcmp.lt.s32.totalorder %v497, 0
        %vm534 = vcmp.lt.s32.totalorder %v504, 0
        %vm535 = vcmp.lt.s32.totalorder %v511, 0
        %vm536 = vcmp.lt.s32.totalorder %v518, 0
        %vm537 = vcmp.lt.s32.totalorder %v525, 0
        %vm538 = vmand %vm532, %vm526
        %vm539 = vmand %vm533, %vm527
        %vm540 = vmand %vm534, %vm528
        %vm541 = vmand %vm535, %vm529
        %vm542 = vmand %vm536, %vm530
        %vm543 = vmand %vm537, %vm531
        %v544 = vadd.s32 %v490, 16
        %v545 = vadd.s32 %v497, 16
        %v546 = vadd.s32 %v504, 16
        %v547 = vadd.s32 %v511, 16
        %v548 = vadd.s32 %v518, 16
        %v549 = vadd.s32 %v525, 16
        %v550 = vsel %vm538, %v544, %v490
        %v551 = vsel %vm539, %v545, %v497
        %v552 = vsel %vm540, %v546, %v504
        %v553 = vsel %vm541, %v547, %v511
        %v554 = vsel %vm542, %v548, %v518
        %v555 = vsel %vm543, %v549, %v525
        %vm556 = vcmp.ne.s32.totalorder %v550, 0
        %vm557 = vcmp.ne.s32.totalorder %v551, 0
        %vm558 = vcmp.ne.s32.totalorder %v552, 0
        %vm559 = vcmp.ne.s32.totalorder %v553, 0
        %vm560 = vcmp.ne.s32.totalorder %v554, 0
        %vm561 = vcmp.ne.s32.totalorder %v555, 0
        %vm562 = vcmask 1040384
        %v563 = vrot.slane %v166, 7
        %v564 = vrot.slane %v167, 7
        %v565 = vsel %vm562, %v563, %v564
        %v566 = vrot.slane %v168, 7
        %v567 = vsel %vm562, %v564, %v566
        %v568 = vrot.slane %v169, 7
        %v569 = vsel %vm562, %v566, %v568
        %v570 = vrot.slane %v170, 7
        %v571 = vsel %vm562, %v568, %v570
        %v572 = vrot.slane %v171, 7
        %v573 = vsel %vm562, %v570, %v572
        %v580 = vsub.f32 %v166, %v563
        %v581 = vsub.f32 %v167, %v565
        %v582 = vsub.f32 %v168, %v567
        %v583 = vsub.f32 %v169, %v569
        %v584 = vsub.f32 %v170, %v571
        %v585 = vsub.f32 %v171, %v573
        %v586 = vand.u32 2147483647, %v580
        %v587 = vand.u32 2147483647, %v581
        %v588 = vand.u32 2147483647, %v582
        %v589 = vand.u32 2147483647, %v583
        %v590 = vand.u32 2147483647, %v584
        %v591 = vand.u32 2147483647, %v585
        %v592 = vrot.slane %v172, 7
        %v593 = vrot.slane %v173, 7
        %v594 = vsel %vm562, %v592, %v593
        %v595 = vrot.slane %v174, 7
        %v596 = vsel %vm562, %v593, %v595
        %v597 = vrot.slane %v175, 7
        %v598 = vsel %vm562, %v595, %v597
        %v599 = vrot.slane %v176, 7
        %v600 = vsel %vm562, %v597, %v599
        %v601 = vrot.slane %v177, 7
        %v602 = vsel %vm562, %v599, %v601
        %v609 = vsub.f32 %v172, %v592
        %v610 = vsub.f32 %v173, %v594
        %v611 = vsub.f32 %v174, %v596
        %v612 = vsub.f32 %v175, %v598
        %v613 = vsub.f32 %v176, %v600
        %v614 = vsub.f32 %v177, %v602
        %v615 = vand.u32 2147483647, %v609
        %v616 = vand.u32 2147483647, %v610
        %v617 = vand.u32 2147483647, %v611
        %v618 = vand.u32 2147483647, %v612
        %v619 = vand.u32 2147483647, %v613
        %v620 = vand.u32 2147483647, %v614
        %v621 = vsub.f32 %v586, %v615
        %v622 = vsub.f32 %v587, %v616
        %v623 = vsub.f32 %v588, %v617
        %v624 = vsub.f32 %v589, %v618
        %v625 = vsub.f32 %v590, %v619
        %v626 = vsub.f32 %v591, %v620
        %v627 = vand.u32 2147483647, %v621
        %v628 = vand.u32 2147483647, %v622
        %v629 = vand.u32 2147483647, %v623
        %v630 = vand.u32 2147483647, %v624
        %v631 = vand.u32 2147483647, %v625
        %v632 = vand.u32 2147483647, %v626
        %v633 = vsel %vm556, 1, 0
        %v634 = vsel %vm557, 1, 0
        %v635 = vsel %vm558, 1, 0
        %v636 = vsel %vm559, 1, 0
        %v637 = vsel %vm560, 1, 0
        %v638 = vsel %vm561, 1, 0
        %vm639 = vcmp.eq.s32.totalorder %v633, 1
        %vm640 = vcmp.eq.s32.totalorder %v634, 1
        %vm641 = vcmp.eq.s32.totalorder %v635, 1
        %vm642 = vcmp.eq.s32.totalorder %v636, 1
        %vm643 = vcmp.eq.s32.totalorder %v637, 1
        %vm644 = vcmp.eq.s32.totalorder %v638, 1
        %vm651 = vcmask 1046528
        %v652 = vrot.slane %v627, 1
        %v653 = vrot.slane %v628, 1
        %v654 = vsel %vm651, %v652, %v653
        %v655 = vrot.slane %v629, 1
        %v656 = vsel %vm651, %v653, %v655
        %v657 = vrot.slane %v630, 1
        %v658 = vsel %vm651, %v655, %v657
        %v659 = vrot.slane %v631, 1
        %v660 = vsel %vm651, %v657, %v659
        %v661 = vrot.slane %v632, 1
        %v662 = vsel %vm651, %v659, %v661
        %v669 = vsel %vm639, %v654, 0.0
        %v670 = vsel %vm640, %v656, 0.0
        %v671 = vsel %vm641, %v658, 0.0
        %v672 = vsel %vm642, %v660, 0.0
        %v673 = vsel %vm643, %v662, 0.0
        %v674 = vsel %vm644, %v661, 0.0
        %vm675 = vcmask 130048
        %v676 = vsel %vm675, %v669, 0.0
        %v677 = vsel %vm675, %v670, 0.0
        %v678 = vadd.f32 %v676, %v677
        %v679 = vsel %vm675, %v671, 0.0
        %v680 = vadd.f32 %v678, %v679
        %v681 = vsel %vm675, %v672, 0.0
        %v682 = vadd.f32 %v680, %v681
        %v683 = vsel %vm675, %v673, 0.0
        %v684 = vadd.f32 %v682, %v683
        %vm685 = vcmask 129024
        %v686 = vsel %vm685, %v674, 0.0
        %v687 = vadd.f32 %v684, %v686
        %688 = vadd.xlane.f32.xlu0 %v687
        %v689 = vpop.xlane.xlu0 %688
        %v690 = vrot.slane %v689, 4
        %v691 = vadd.f32 %v689, %v690
        %v692 = vrot.slane %v691, 2
        %v693 = vadd.f32 %v691, %v692
        %v694 = vrot.slane %v693, 1
        %v695 = vadd.f32 %v693, %v694
        %s696 = vtos %v695
        %s697 = sadd.f32 %s477, %s696
        %vm698 = vcmp.eq.s32.totalorder %v275, 0
        %vm699 = vcmp.eq.s32.totalorder %v276, 0
        %vm700 = vcmp.eq.s32.totalorder %v277, 0
        %vm701 = vcmp.eq.s32.totalorder %v278, 0
        %vm702 = vcmp.eq.s32.totalorder %v279, 0
        %vm703 = vcmp.eq.s32.totalorder %v280, 0
        %v704 = vsel %vm698, 1, 0
        %v705 = vsel %vm699, 1, 0
        %v706 = vsel %vm700, 1, 0
        %v707 = vsel %vm701, 1, 0
        %v708 = vsel %vm702, 1, 0
        %v709 = vsel %vm703, 1, 0
        %vm710 = vcmp.eq.s32.totalorder %v704, 1
        %vm711 = vcmp.eq.s32.totalorder %v705, 1
        %vm712 = vcmp.eq.s32.totalorder %v706, 1
        %vm713 = vcmp.eq.s32.totalorder %v707, 1
        %vm714 = vcmp.eq.s32.totalorder %v708, 1
        %vm715 = vcmp.eq.s32.totalorder %v709, 1
        %v716 = vsel %vm710, %v196, 0.0
        %v717 = vsel %vm711, %v197, 0.0
        %v718 = vsel %vm712, %v198, 0.0
        %v719 = vsel %vm713, %v199, 0.0
        %v720 = vsel %vm714, %v200, 0.0
        %v721 = vsel %vm715, %v201, 0.0
        %v722 = vsel %vm675, %v716, 0.0
        %v723 = vsel %vm675, %v717, 0.0
        %v724 = vadd.f32 %v722, %v723
        %v725 = vsel %vm675, %v718, 0.0
        %v726 = vadd.f32 %v724, %v725
        %v727 = vsel %vm675, %v719, 0.0
        %v728 = vadd.f32 %v726, %v727
        %v729 = vsel %vm675, %v720, 0.0
        %v730 = vadd.f32 %v728, %v729
        %v731 = vsel %vm675, %v721, 0.0
        %v732 = vadd.f32 %v730, %v731
        %733 = vadd.xlane.f32.xlu0 %v732
        %v734 = vpop.xlane.xlu0 %733
        %v735 = vrot.slane %v734, 4
        %v736 = vadd.f32 %v734, %v735
        %v737 = vrot.slane %v736, 2
        %v738 = vadd.f32 %v736, %v737
        %v739 = vrot.slane %v738, 1
        %v740 = vadd.f32 %v738, %v739
        %s741 = vtos %v740
        %s742 = sadd.f32 %s697, %s741
        %vm743 = vcmp.eq.s32.totalorder %v275, 15
        %vm744 = vcmp.eq.s32.totalorder %v276, 15
        %vm745 = vcmp.eq.s32.totalorder %v277, 15
        %vm746 = vcmp.eq.s32.totalorder %v278, 15
        %vm747 = vcmp.eq.s32.totalorder %v279, 15
        %vm748 = vcmp.eq.s32.totalorder %v280, 15
        %v749 = vsel %vm743, 1, 0
        %v750 = vsel %vm744, 1, 0
        %v751 = vsel %vm745, 1, 0
        %v752 = vsel %vm746, 1, 0
        %v753 = vsel %vm747, 1, 0
        %v754 = vsel %vm748, 1, 0
        %vm755 = vcmp.eq.s32.totalorder %v749, 1
        %vm756 = vcmp.eq.s32.totalorder %v750, 1
        %vm757 = vcmp.eq.s32.totalorder %v751, 1
        %vm758 = vcmp.eq.s32.totalorder %v752, 1
        %vm759 = vcmp.eq.s32.totalorder %v753, 1
        %vm760 = vcmp.eq.s32.totalorder %v754, 1
        %v761 = vsel %vm755, %v196, 0.0
        %v762 = vsel %vm756, %v197, 0.0
        %v763 = vsel %vm757, %v198, 0.0
        %v764 = vsel %vm758, %v199, 0.0
        %v765 = vsel %vm759, %v200, 0.0
        %v766 = vsel %vm760, %v201, 0.0
        %v767 = vsel %vm675, %v761, 0.0
        %v768 = vsel %vm675, %v762, 0.0
        %v769 = vadd.f32 %v767, %v768
        %v770 = vsel %vm675, %v763, 0.0
        %v771 = vadd.f32 %v769, %v770
        %v772 = vsel %vm675, %v764, 0.0
        %v773 = vadd.f32 %v771, %v772
        %v774 = vsel %vm675, %v765, 0.0
        %v775 = vadd.f32 %v773, %v774
        %v776 = vsel %vm675, %v766, 0.0
        %v777 = vadd.f32 %v775, %v776
        %778 = vadd.xlane.f32.xlu0 %v777
        %v779 = vpop.xlane.xlu0 %778
        %v780 = vrot.slane %v779, 4
        %v781 = vadd.f32 %v779, %v780
        %v782 = vrot.slane %v781, 2
        %v783 = vadd.f32 %v781, %v782
        %v784 = vrot.slane %v783, 1
        %v785 = vadd.f32 %v783, %v784
        %s786 = vtos %v785
        %s787 = sadd.f32 %s742, %s786
        %v788 = vlaneseq
        %v789 = vand.u32 %v788, 127
        %vm790 = vcmp.eq.s32.totalorder %v203, 0
        %vm791 = vcmp.eq.s32.totalorder %v789, 0
        %vm792 = vmand %vm790, %vm791
        %v793 = vstv %s787
        %v794 = vsel %vm792, %v793, 0.0
        %795 = vst.msk [vmem:[%s153] sm:$0xff] %vm675, %v794
        %s796 = sand.u32 %s76, 1
        %s797 = scalar_lea.sflag [#allocation3], %s796
        %s798 = sand.u32 %s76, 1
        %s799 = smul.addr %s798, 8
        %s800 = scalar_lea.vmem [#allocation2], %s799
        // Predicated region
        $region29: #{tpu_custom_call.1} parent=27 // pred_check
          %p801 = pneg %p86
        $region30: #{tpu_custom_call.1} parent=27 // pred_check_branch
          %803 = sbr.rel (%p801) target = $region32
        $region31: #{tpu_custom_call.1} parent=27 // pred_region
          %s805 = ssub.s32 128, 128
          %806 = vsyncadd %s797, %s805
          %s807 = smul.addr %s16, 128
          %s808 = scalar_lea.hbm %s2, %s807
          %s810 = sshll.u32 %s800, 4
          %s811 = int_to_ptr.vmem [resolvable:$true] %s810
          %813 = dma.vmem_to_hbm [thread:$0]  %s811, 128, %s808, %s797
        $region32: #{tpu_custom_call.1} parent=27 // pred_fallthru
          _
      $region28: #{tpu_custom_call.1} parent=5 // pred_fallthru
        _
      %p814 = scmp.le.s32.totalorder 2, %s11
      // Predicated region
      $region33: #{tpu_custom_call.1} parent=5 // pred_check
        %p815 = pneg %p814
      $region34: #{tpu_custom_call.1} parent=5 // pred_check_branch
        %817 = sbr.rel (%p815) target = $region36
      $region35: #{tpu_custom_call.1} parent=5 // pred_region
        %s818 = ssub.s32 %s11, 2
        // Predicated region
        $region37: #{tpu_custom_call.1} parent=35 // pred_check
          %p819 = pneg %p92
        $region38: #{tpu_custom_call.1} parent=35 // pred_check_branch
          %821 = sbr.rel (%p819) target = $region40
        $region39: #{tpu_custom_call.1} parent=35 // pred_region
          %s822 = sand.u32 %s77, 1
          %s823 = scalar_lea.sflag [#allocation3], %s822
          %s824 = sand.u32 %s77, 1
          %s825 = smul.addr %s824, 8
          %s826 = scalar_lea.vmem [#allocation2], %s825
          %827 = dma.done %s823, 128
        $region40: #{tpu_custom_call.1} parent=35 // pred_fallthru
          _
      $region36: #{tpu_custom_call.1} parent=5 // pred_fallthru
        _
    $region6: #{tpu_custom_call.1} parent=1 // loop_footer
      %s15 = sadd.s32 1, %s11
    $region7: #{tpu_custom_call.1} parent=1 // loop_footer_branch
      %10 = sbr.rel target = $region3
    $region8: #{tpu_custom_call.1} parent=1 // loop_exit
      _
    %828 = vsyncpa [#allocation3], 1
    %s829 = scalar_lea.sflag [#allocation3], 1
    %830 = vsyncpa %s829, 1

</llo_original>
